<compile_context>
chip_gen: v7x
topology: tpu7x:2x2x1
jax: 0.10.0
libtpu: 0.0.40
codegen_flags: <defaults>
</compile_context>

<pallas_src>
import functools

import numpy as np
import jax
import jax.numpy as jnp
from jax import lax
from jax.experimental import pallas as pl
from jax.experimental.pallas import tpu as pltpu


def _round_up(x, m):
    return ((x + m - 1) // m) * m


_NCORE_SPLIT = 2  # v7x: 2 TensorCores/chip; harmless (sequential) on 1-TC chips.


def _plan(b, fd, itemsize):
    """Pick batch tile, padded batch, per-core step count and a VMEM limit."""
    try:
        cap = int(pltpu.get_tpu_info().vmem_capacity_bytes)
    except Exception:
        cap = 128 * 1024 * 1024
    # Two big double-buffered (TB, 2D) streams (anchor + 'third') dominate VMEM.
    budget = max(4 << 20, min(24 << 20, cap // 4))
    cap_rows = max(8, (budget // (2 * 2 * itemsize * max(fd, 1))) // 8 * 8)
    tb = max(8, min(512, cap_rows, _round_up(b, 8)))
    tb = (tb // 8) * 8
    bp = _round_up(b, _NCORE_SPLIT * tb)
    ninner = bp // (_NCORE_SPLIT * tb)
    vmem_limit = int(max(32 << 20, min(cap - (8 << 20), 2 * budget + (16 << 20))))
    return tb, bp, ninner, _NCORE_SPLIT, vmem_limit


# ----------------------------------------------------------------------------
# Fused KL + Bhattacharyya-triplet kernel (batch-tiled accumulator pattern)
# ----------------------------------------------------------------------------
def _make_fused_kernel(tb, dim, margin):
    margin = float(margin)

    def kernel(count_ref,                                   # scalar prefetch (SMEM)
               a_ref, nxt_ref, top_ref, t3_ref, sgn_ref,    # inputs
               kl_ref, num_ref, den_ref,                    # (1,1,1) partial outputs
               sec_buf):                                    # VMEM scratch (tb, 2*dim)
        i = pl.program_id(1)
        g = pl.program_id(0) * pl.num_programs(1) + i       # global tile index

        @pl.when(i == 0)
        def _init():
            kl_ref[...] = jnp.zeros_like(kl_ref)
            num_ref[...] = jnp.zeros_like(num_ref)
            den_ref[...] = jnp.zeros_like(den_ref)

        count = count_ref[0]                                 # valid (masked-in) rows

        a = a_ref[...].astype(jnp.float32)                   # (tb, 2*dim): emb | log_var
        u1 = a[:, :dim]
        lv1 = a[:, dim:]
        s1 = jnp.exp(lv1)

        # --- KL term: one fused reduction; zero-padded rows contribute 0 ----
        kl_ref[...] += 0.5 * jnp.sum(u1 * u1 + s1 - lv1 - 1.0)

        # --- build the 'second' tile in-kernel (no HBM gather round-trip) ---
        # rows 0..tb-2 <- anchor rows 1..tb-1 ; row tb-1 <- first row of next tile
        sec_buf[pl.ds(0, tb - 1), :] = a_ref[pl.ds(1, tb - 1), :].astype(jnp.float32)
        sec_buf[pl.ds(tb - 1, 1), :] = nxt_ref[pl.ds(0, 1), :].astype(jnp.float32)
        sec = sec_buf[...]
        grow = g * tb + lax.broadcasted_iota(jnp.int32, (tb, 1), 0)   # global row ids
        top_row = top_ref[pl.ds(0, 1), :].astype(jnp.float32)         # global row 0
        sec = jnp.where(grow == count - 1, top_row, sec)              # circular wrap
        u2 = sec[:, :dim]
        lv2 = sec[:, dim:]
        s2 = jnp.exp(lv2)

        t3 = t3_ref[...].astype(jnp.float32)                 # gathered 'third' rows
        u3 = t3[:, :dim]
        lv3 = t3[:, dim:]
        s3 = jnp.exp(lv3)

        # sum(log(sigma)) == sum(log_var): no exp->log round trip
        slv1 = jnp.sum(lv1, axis=1, keepdims=True)
        slv2 = jnp.sum(lv2, axis=1, keepdims=True)
        slv3 = jnp.sum(lv3, axis=1, keepdims=True)

        def bhatt(du, sa, sb, sla, slb):
            sm = 0.5 * (sa + sb)
            d1 = jnp.sum(du * du / sm, axis=1, keepdims=True) * 0.125
            d2 = 0.5 * (jnp.sum(jnp.log(sm), axis=1, keepdims=True) - 0.5 * (sla + slb))
            return d1 + d2                                    # (tb, 1)

        d12 = bhatt(u1 - u2, s1, s2, slv1, slv2)
        d13 = bhatt(u1 - u3, s1, s3, slv1, slv3)

        sgn = sgn_ref[...].astype(jnp.float32)                # (tb, 1)
        w = (grow < count).astype(jnp.float32)                # valid-row weight
        cons = (d13 - d12) * sgn + margin
        abs_sgn = jnp.abs(sgn)
        num_ref[...] += jnp.sum(jnp.maximum(cons, 0.0) * abs_sgn * w)
        den_ref[...] += jnp.sum((cons > 0.0).astype(jnp.float32) * abs_sgn * w)

    return kernel


def _fused_losses(count, fused_p, third_fused, sign2d, *, dim, tb, ninner, ncores,
                  margin, vmem_limit_bytes):
    bp, fd = fused_p.shape
    nblk8 = bp // 8
    itemsize = fused_p.dtype.itemsize

    a_map = lambda c, i, cnt: (c * ninner + i, 0)
    nxt_map = lambda c, i, cnt: (
        jnp.minimum((c * ninner + i + 1) * (tb // 8), nblk8 - 1), 0)
    top_map = lambda c, i, cnt: (0, 0)
    out_map = lambda c, i, cnt: (c, 0, 0)

    cost = pl.CostEstimate(
        flops=int(20 * bp * fd),
        transcendentals=int(7 * bp * dim),
        bytes_accessed=int((2 * bp * fd + bp) * itemsize + 3 * ncores * 4))

    kern = _make_fused_kernel(tb, dim, margin)
    kl_p, num_p, den_p = pl.pallas_call(
        kern,
        out_shape=(jax.ShapeDtypeStruct((ncores, 1, 1), jnp.float32),
                   jax.ShapeDtypeStruct((ncores, 1, 1), jnp.float32),
                   jax.ShapeDtypeStruct((ncores, 1, 1), jnp.float32)),
        grid_spec=pltpu.PrefetchScalarGridSpec(
            num_scalar_prefetch=1,
            grid=(ncores, ninner),
            in_specs=[pl.BlockSpec((tb, fd), a_map),      # anchor (emb | log_var)
                      pl.BlockSpec((8, fd), nxt_map),     # next-tile boundary rows
                      pl.BlockSpec((8, fd), top_map),     # global first rows (wrap)
                      pl.BlockSpec((tb, fd), a_map),      # third (emb | log_var)
                      pl.BlockSpec((tb, 1), a_map)],      # anchor sign
            out_specs=[pl.BlockSpec((1, 1, 1), out_map),
                       pl.BlockSpec((1, 1, 1), out_map),
                       pl.BlockSpec((1, 1, 1), out_map)],
            scratch_shapes=[pltpu.VMEM((tb, fd), jnp.float32)]),
        compiler_params=pltpu.CompilerParams(
            dimension_semantics=("parallel", "arbitrary"),
            vmem_limit_bytes=int(vmem_limit_bytes)),
        cost_estimate=cost,
    )(count, fused_p, fused_p, fused_p, third_fused, sign2d)
    return kl_p, num_p, den_p


# ----------------------------------------------------------------------------
# Module wrapper (ProbOrdiLoss.forward), distance='Bhattacharyya'.  Fully
# jittable: mask compaction is a device-side stable permutation + row count.
# ----------------------------------------------------------------------------
@functools.partial(jax.jit, static_argnames=("alpha_coeff", "beta_coeff", "margin"))
def prob_ordi_loss_forward(logit, emb, log_var, target_label, years_last_followup,
                           alpha_coeff=1.0, beta_coeff=1.0, margin=0.2):
    class_dim = logit.shape[-1]
    b, d = emb.shape

    target_ = jnp.minimum(target_label, class_dim - 1)   # clamp (in-place in torch)
    mask = 1 - ((target_ == class_dim - 1)
                & (years_last_followup < class_dim - 1)).astype(jnp.int32)
    count = jnp.sum(mask).astype(jnp.int32)

    # stable permutation: valid rows first, original order preserved.
    order = jnp.argsort(1 - mask, stable=True)

    # fuse emb & log_var along the feature axis (native dtype preserved)
    fused = jnp.concatenate([emb, log_var.astype(emb.dtype)], axis=1)   # (b, 2d)
    fused_pm = jnp.take(fused, order, axis=0)                           # permuted
    t_b = jnp.take(target_, order).astype(jnp.float32)                  # (b,)

    # ---- second / third / sign bookkeeping at the UNPADDED size b ----------
    idx_b = jnp.arange(b, dtype=jnp.int32)
    safe_cnt = jnp.maximum(count, 1)
    second_idx = (idx_b + 1) % safe_cnt
    dd = jnp.abs(t_b - jnp.take(t_b, second_idx))                       # (b,)
    tdis = jnp.abs(jnp.abs(t_b[:, None] - t_b[None, :]) - dd[:, None])  # (b, b)
    diag = idx_b[:, None] == idx_b[None, :]
    tdis = jnp.where(diag, jnp.float32(1000.0), tdis)
    tdis = jnp.where(tdis == 0.0, jnp.float32(700.0), tdis)
    tdis = jnp.where(idx_b[None, :] < count, tdis, jnp.float32(1e9))    # mask invalid cols
    third_idx = jnp.argmin(tdis, axis=1).astype(jnp.int32)
    sign = jnp.sign(dd - jnp.abs(t_b - jnp.take(t_b, third_idx)))       # (b,)

    fd = 2 * d
    tb, bp, ninner, ncores, vmem_limit = _plan(b, fd, fused.dtype.itemsize)
    pad = bp - b

    # TODO(synk): move this gather in-kernel via scalar-prefetched indices + DMA.
    third_fused = jnp.take(fused_pm, third_idx, axis=0)                 # (b, 2d)
    sign2d = sign.astype(jnp.float32).reshape(b, 1)
    fused_pp = fused_pm
    if pad:
        fused_pp = jnp.pad(fused_pp, ((0, pad), (0, 0)))   # zero rows add 0 to KL
        third_fused = jnp.pad(third_fused, ((0, pad), (0, 0)))
        sign2d = jnp.pad(sign2d, ((0, pad), (0, 0)))

    kl_p, num_p, den_p = _fused_losses(
        count.reshape(1), fused_pp, third_fused, sign2d,
        dim=d, tb=tb, ninner=ninner, ncores=ncores, margin=margin,
        vmem_limit_bytes=vmem_limit)

    kl = jnp.sum(kl_p) / b
    num = jnp.sum(num_p)
    den = jnp.sum(den_p)
    safe_den = jnp.where(den > 0.0, den, 1.0)
    triple = jnp.where(den > 0.0, num / safe_den, 0.0)

    return (None,
            kl * alpha_coeff,
            triple * beta_coeff,
            alpha_coeff * kl + beta_coeff * triple)


# ----------------------------------------------------------------------------
# Pure NumPy reference (mirror of the PyTorch forward) for a sanity check
# ----------------------------------------------------------------------------
def reference_forward(logit, emb, log_var, target_label, years, alpha, beta, margin):
    class_dim = logit.shape[-1]
    emb = np.asarray(emb, np.float64)
    log_var = np.asarray(log_var, np.float64)
    target_ = np.minimum(np.asarray(target_label), class_dim - 1)
    years = np.asarray(years)
    mask = 1 - ((target_ == class_dim - 1) & (years < class_dim - 1)).astype(np.int32)

    kl = np.mean(np.sum(emb ** 2 + np.exp(log_var) - log_var - 1.0, axis=1) * 0.5)

    idx = np.nonzero(mask == 1)[0]
    if idx.size > 0:
        e = emb[idx]
        lv = log_var[idx]
        t = target_[idx].astype(np.float64)
        var = np.exp(lv)
        bm = e.shape[0]
        anchor = np.arange(bm)
        second = (anchor + 1) % bm
        tdis = np.abs(t[:, None] - t[None, :])
        tdis = np.abs(tdis - np.abs(t[anchor] - t[second])[:, None])
        tdis = tdis + np.eye(bm) * 1000.0
        tdis[tdis == 0] = 700.0
        third = np.argmin(tdis, axis=1)

        def bhatt(u1, s1, u2, s2):
            sm = (s1 + s2) / 2.0
            d1 = np.sum((u1 - u2) ** 2 / sm, axis=1) / 8.0
            d2 = 0.5 * (np.sum(np.log(sm), axis=1)
                        - 0.5 * (np.sum(np.log(s1), axis=1) + np.sum(np.log(s2), axis=1)))
            return d1 + d2

        d12 = bhatt(e[anchor], var[anchor], e[second], var[second])
        d13 = bhatt(e[anchor], var[anchor], e[third], var[third])
        sgn = np.sign(np.abs(t[anchor] - t[second]) - np.abs(t[anchor] - t[third]))
        cons = (d13 - d12) * sgn + margin
        loss_anchor = np.maximum(0.0, cons) * np.abs(sgn)
        loss_mask = (cons > 0).astype(np.float64)
        denom = np.sum(np.abs(sgn) * loss_mask)
        triple = float(np.sum(loss_anchor) / denom) if denom > 0 else 0.0
    else:
        triple = 0.0
    return alpha * kl, beta * triple, alpha * kl + beta * triple


if __name__ == "__main__":
    key = jax.random.PRNGKey(0)
    B, D, C = 8, 32, 4   # batch=8, embedding dim=32, class_dim=4

    k1, k2, k3, k4, k5 = jax.random.split(key, 5)
    logit = jax.random.normal(k1, (B, C), jnp.float32)
    emb = jax.random.normal(k2, (B, D), jnp.float32)
    log_var = 0.1 * jax.random.normal(k3, (B, D), jnp.float32)
    target_label = jax.random.randint(k4, (B,), 0, C + 2, jnp.int32)
    years_last_followup = jax.random.randint(k5, (B,), 0, C + 2, jnp.int32)

    alpha_coeff, beta_coeff, margin = 1.0, 1.0, 0.2

    outs = prob_ordi_loss_forward(logit, emb, log_var, target_label,
                                  years_last_followup,
                                  alpha_coeff=alpha_coeff,
                                  beta_coeff=beta_coeff,
                                  margin=margin)
    main_loss, kl_a, tri_b, total = outs
    jax.block_until_ready(total)

    # sanity check against a float64 NumPy mirror of the PyTorch forward
    ref_kl, ref_tri, ref_total = reference_forward(
        logit, emb, log_var, target_label, years_last_followup,
        alpha_coeff, beta_coeff, margin)
    np.testing.assert_allclose(float(kl_a), ref_kl, rtol=5e-3, atol=1e-3)
    np.testing.assert_allclose(float(tri_b), ref_tri, rtol=5e-3, atol=1e-3)
    np.testing.assert_allclose(float(total), ref_total, rtol=5e-3, atol=1e-3)

    print("KERNEL_OK")
</pallas_src>

<mosaic_0001>
module attributes {stable_mosaic.version = 11 : i64} {
  func.func @kernel(%arg0: i32, %arg1: i32, %arg2: memref<1xi32, #tpu.memory_space<smem>>, %arg3: memref<8x64xf32, #tpu.memory_space<vmem>>, %arg4: memref<8x64xf32, #tpu.memory_space<vmem>>, %arg5: memref<8x64xf32, #tpu.memory_space<vmem>>, %arg6: memref<8x64xf32, #tpu.memory_space<vmem>>, %arg7: memref<8x1xf32, #tpu.memory_space<vmem>>, %arg8: memref<1x1x1xf32, #tpu.memory_space<vmem>>, %arg9: memref<1x1x1xf32, #tpu.memory_space<vmem>>, %arg10: memref<1x1x1xf32, #tpu.memory_space<vmem>>, %arg11: memref<8x64xf32, #tpu.memory_space<vmem>>) attributes {dimension_semantics = [#tpu.dimension_semantics<parallel>, #tpu.dimension_semantics<arbitrary>], iteration_bounds = array<i64: 2, 1>, scalar_prefetch = 1 : i64, scratch_operands = 1 : i64, tpu.core_type = #tpu.core_type<tc>, window_params = [{transform_indices = @transform_0, window_bounds = array<i64: 8, 64>}, {transform_indices = @transform_1, window_bounds = array<i64: 8, 64>}, {transform_indices = @transform_2, window_bounds = array<i64: 8, 64>}, {transform_indices = @transform_3, window_bounds = array<i64: 8, 64>}, {transform_indices = @transform_4, window_bounds = array<i64: 8, 1>}, {transform_indices = @transform_5, window_bounds = array<i64: 1, 1, 1>}, {transform_indices = @transform_6, window_bounds = array<i64: 1, 1, 1>}, {transform_indices = @transform_7, window_bounds = array<i64: 1, 1, 1>}]} {
    %c1_i32 = arith.constant 1 : i32
    %0 = arith.muli %arg0, %c1_i32 : i32
    %1 = arith.addi %0, %arg1 : i32
    %c0_i32 = arith.constant 0 : i32
    %2 = arith.cmpi eq, %arg1, %c0_i32 : i32
    %3 = arith.extui %2 : i1 to i32
    %c0_i32_0 = arith.constant 0 : i32
    %4 = arith.cmpi ne, %3, %c0_i32_0 : i32
    scf.if %4 {
      %cst_58 = arith.constant 0.000000e+00 : f32
      %131 = vector.broadcast %cst_58 : f32 to vector<1x1x1xf32>
      %c0_59 = arith.constant 0 : index
      %c0_60 = arith.constant 0 : index
      %c0_61 = arith.constant 0 : index
      %132 = vector.load %arg8[%c0_59, %c0_60, %c0_61] : memref<1x1x1xf32, #tpu.memory_space<vmem>>, vector<1x1x1xf32>
      tpu.vector_store %arg8[%c0_59, %c0_60, %c0_61], %131 {strides = array<i32>} : memref<1x1x1xf32, #tpu.memory_space<vmem>>, vector<1x1x1xf32>,
      %cst_62 = arith.constant 0.000000e+00 : f32
      %133 = vector.broadcast %cst_62 : f32 to vector<1x1x1xf32>
      %c0_63 = arith.constant 0 : index
      %c0_64 = arith.constant 0 : index
      %c0_65 = arith.constant 0 : index
      %134 = vector.load %arg9[%c0_63, %c0_64, %c0_65] : memref<1x1x1xf32, #tpu.memory_space<vmem>>, vector<1x1x1xf32>
      tpu.vector_store %arg9[%c0_63, %c0_64, %c0_65], %133 {strides = array<i32>} : memref<1x1x1xf32, #tpu.memory_space<vmem>>, vector<1x1x1xf32>,
      %cst_66 = arith.constant 0.000000e+00 : f32
      %135 = vector.broadcast %cst_66 : f32 to vector<1x1x1xf32>
      %c0_67 = arith.constant 0 : index
      %c0_68 = arith.constant 0 : index
      %c0_69 = arith.constant 0 : index
      %136 = vector.load %arg10[%c0_67, %c0_68, %c0_69] : memref<1x1x1xf32, #tpu.memory_space<vmem>>, vector<1x1x1xf32>
      tpu.vector_store %arg10[%c0_67, %c0_68, %c0_69], %135 {strides = array<i32>} : memref<1x1x1xf32, #tpu.memory_space<vmem>>, vector<1x1x1xf32>,
    } else {
    }
    %c0 = arith.constant 0 : index
    %5 = memref.load %arg2[%c0] : memref<1xi32, #tpu.memory_space<smem>>
    %c0_1 = arith.constant 0 : index
    %c0_2 = arith.constant 0 : index
    %6 = vector.load %arg3[%c0_1, %c0_2] : memref<8x64xf32, #tpu.memory_space<vmem>>, vector<8x64xf32>
    %7 = vector.extract_strided_slice %6 {offsets = [0, 0], sizes = [8, 32], strides = [1, 1]} : vector<8x64xf32> to vector<8x32xf32>
    %8 = vector.extract_strided_slice %6 {offsets = [0, 32], sizes = [8, 32], strides = [1, 1]} : vector<8x64xf32> to vector<8x32xf32>
    %9 = math.exp %8 : vector<8x32xf32>
    %c0_3 = arith.constant 0 : index
    %c0_4 = arith.constant 0 : index
    %c0_5 = arith.constant 0 : index
    %10 = vector.load %arg8[%c0_3, %c0_4, %c0_5] : memref<1x1x1xf32, #tpu.memory_space<vmem>>, vector<1x1x1xf32>
    %11 = arith.mulf %7, %7 : vector<8x32xf32>
    %12 = arith.addf %11, %9 : vector<8x32xf32>
    %13 = arith.subf %12, %8 : vector<8x32xf32>
    %cst = arith.constant 1.000000e+00 : f32
    %14 = vector.broadcast %cst : f32 to vector<8x32xf32>
    %15 = arith.subf %13, %14 : vector<8x32xf32>
    %16 = vector.shape_cast %15 : vector<8x32xf32> to vector<1x8x32xf32>
    %cst_6 = arith.constant dense<0.000000e+00> : vector<1xf32>
    %17 = vector.multi_reduction <add>, %16, %cst_6 [1, 2] : vector<1x8x32xf32> to vector<1xf32>
    %18 = vector.shape_cast %17 : vector<1xf32> to vector<1x1x1xf32>
    %19 = vector.extract %18[0, 0, 0] : f32 from vector<1x1x1xf32>
    %cst_7 = arith.constant 5.000000e-01 : f32
    %20 = arith.mulf %cst_7, %19 : f32
    %21 = vector.broadcast %20 : f32 to vector<1x1x1xf32>
    %22 = arith.addf %10, %21 : vector<1x1x1xf32>
    %c0_8 = arith.constant 0 : index
    %c0_9 = arith.constant 0 : index
    %c0_10 = arith.constant 0 : index
    %23 = vector.load %arg8[%c0_8, %c0_9, %c0_10] : memref<1x1x1xf32, #tpu.memory_space<vmem>>, vector<1x1x1xf32>
    tpu.vector_store %arg8[%c0_8, %c0_9, %c0_10], %22 {strides = array<i32>} : memref<1x1x1xf32, #tpu.memory_space<vmem>>, vector<1x1x1xf32>,
    %c1 = arith.constant 1 : index
    %c0_11 = arith.constant 0 : index
    %24 = vector.load %arg3[%c1, %c0_11] : memref<8x64xf32, #tpu.memory_space<vmem>>, vector<7x64xf32>
    %c0_12 = arith.constant 0 : index
    %c0_13 = arith.constant 0 : index
    %25 = vector.load %arg11[%c0_12, %c0_13] : memref<8x64xf32, #tpu.memory_space<vmem>>, vector<7x64xf32>
    tpu.vector_store %arg11[%c0_12, %c0_13], %24 {strides = array<i32>} : memref<8x64xf32, #tpu.memory_space<vmem>>, vector<7x64xf32>,
    %c0_14 = arith.constant 0 : index
    %c0_15 = arith.constant 0 : index
    %26 = vector.load %arg4[%c0_14, %c0_15] : memref<8x64xf32, #tpu.memory_space<vmem>>, vector<1x64xf32>
    %c7 = arith.constant 7 : index
    %c0_16 = arith.constant 0 : index
    %27 = vector.load %arg11[%c7, %c0_16] : memref<8x64xf32, #tpu.memory_space<vmem>>, vector<1x64xf32>
    tpu.vector_store %arg11[%c7, %c0_16], %26 {strides = array<i32>} : memref<8x64xf32, #tpu.memory_space<vmem>>, vector<1x64xf32>,
    %c0_17 = arith.constant 0 : index
    %c0_18 = arith.constant 0 : index
    %28 = vector.load %arg11[%c0_17, %c0_18] : memref<8x64xf32, #tpu.memory_space<vmem>>, vector<8x64xf32>
    %c8_i32 = arith.constant 8 : i32
    %29 = arith.muli %1, %c8_i32 : i32
    %30 = tpu.iota {dimensions = array<i32: 0>} : vector<8x1xi32>
    %31 = vector.broadcast %29 : i32 to vector<8x1xi32>
    %32 = arith.addi %31, %30 : vector<8x1xi32>
    %c0_19 = arith.constant 0 : index
    %c0_20 = arith.constant 0 : index
    %33 = vector.load %arg5[%c0_19, %c0_20] : memref<8x64xf32, #tpu.memory_space<vmem>>, vector<1x64xf32>
    %c1_i32_21 = arith.constant 1 : i32
    %34 = arith.subi %5, %c1_i32_21 : i32
    %35 = vector.broadcast %34 : i32 to vector<8x1xi32>
    %36 = arith.cmpi eq, %32, %35 : vector<8x1xi32>
    %37 = vector.shape_cast %36 : vector<8x1xi1> to vector<8x1xi1>
    %38 = vector.broadcast %37 : vector<8x1xi1> to vector<8x64xi1>
    %39 = vector.shape_cast %33 : vector<1x64xf32> to vector<1x64xf32>
    %40 = vector.broadcast %39 : vector<1x64xf32> to vector<8x64xf32>
    %41 = arith.select %38, %40, %28 : vector<8x64xi1>, vector<8x64xf32>
    %42 = vector.extract_strided_slice %41 {offsets = [0, 0], sizes = [8, 32], strides = [1, 1]} : vector<8x64xf32> to vector<8x32xf32>
    %43 = vector.extract_strided_slice %41 {offsets = [0, 32], sizes = [8, 32], strides = [1, 1]} : vector<8x64xf32> to vector<8x32xf32>
    %44 = math.exp %43 : vector<8x32xf32>
    %c0_22 = arith.constant 0 : index
    %c0_23 = arith.constant 0 : index
    %45 = vector.load %arg6[%c0_22, %c0_23] : memref<8x64xf32, #tpu.memory_space<vmem>>, vector<8x64xf32>
    %46 = vector.extract_strided_slice %45 {offsets = [0, 0], sizes = [8, 32], strides = [1, 1]} : vector<8x64xf32> to vector<8x32xf32>
    %47 = vector.extract_strided_slice %45 {offsets = [0, 32], sizes = [8, 32], strides = [1, 1]} : vector<8x64xf32> to vector<8x32xf32>
    %48 = math.exp %47 : vector<8x32xf32>
    %cst_24 = arith.constant dense<0.000000e+00> : vector<8xf32>
    %49 = vector.multi_reduction <add>, %8, %cst_24 [1] : vector<8x32xf32> to vector<8xf32>
    %50 = vector.shape_cast %49 : vector<8xf32> to vector<8x1xf32>
    %cst_25 = arith.constant dense<0.000000e+00> : vector<8xf32>
    %51 = vector.multi_reduction <add>, %43, %cst_25 [1] : vector<8x32xf32> to vector<8xf32>
    %52 = vector.shape_cast %51 : vector<8xf32> to vector<8x1xf32>
    %cst_26 = arith.constant dense<0.000000e+00> : vector<8xf32>
    %53 = vector.multi_reduction <add>, %47, %cst_26 [1] : vector<8x32xf32> to vector<8xf32>
    %54 = vector.shape_cast %53 : vector<8xf32> to vector<8x1xf32>
    %55 = arith.subf %7, %42 : vector<8x32xf32>
    %56 = arith.addf %9, %44 : vector<8x32xf32>
    %cst_27 = arith.constant 5.000000e-01 : f32
    %57 = vector.broadcast %cst_27 : f32 to vector<8x32xf32>
    %58 = arith.mulf %57, %56 : vector<8x32xf32>
    %59 = arith.mulf %55, %55 : vector<8x32xf32>
    %60 = arith.divf %59, %58 : vector<8x32xf32>
    %cst_28 = arith.constant dense<0.000000e+00> : vector<8xf32>
    %61 = vector.multi_reduction <add>, %60, %cst_28 [1] : vector<8x32xf32> to vector<8xf32>
    %62 = vector.shape_cast %61 : vector<8xf32> to vector<8x1xf32>
    %cst_29 = arith.constant 1.250000e-01 : f32
    %63 = vector.broadcast %cst_29 : f32 to vector<8x1xf32>
    %64 = arith.mulf %62, %63 : vector<8x1xf32>
    %65 = math.log %58 : vector<8x32xf32>
    %cst_30 = arith.constant dense<0.000000e+00> : vector<8xf32>
    %66 = vector.multi_reduction <add>, %65, %cst_30 [1] : vector<8x32xf32> to vector<8xf32>
    %67 = vector.shape_cast %66 : vector<8xf32> to vector<8x1xf32>
    %68 = arith.addf %50, %52 : vector<8x1xf32>
    %cst_31 = arith.constant 5.000000e-01 : f32
    %69 = vector.broadcast %cst_31 : f32 to vector<8x1xf32>
    %70 = arith.mulf %69, %68 : vector<8x1xf32>
    %71 = arith.subf %67, %70 : vector<8x1xf32>
    %cst_32 = arith.constant 5.000000e-01 : f32
    %72 = vector.broadcast %cst_32 : f32 to vector<8x1xf32>
    %73 = arith.mulf %72, %71 : vector<8x1xf32>
    %74 = arith.addf %64, %73 : vector<8x1xf32>
    %75 = arith.subf %7, %46 : vector<8x32xf32>
    %76 = arith.addf %9, %48 : vector<8x32xf32>
    %cst_33 = arith.constant 5.000000e-01 : f32
    %77 = vector.broadcast %cst_33 : f32 to vector<8x32xf32>
    %78 = arith.mulf %77, %76 : vector<8x32xf32>
    %79 = arith.mulf %75, %75 : vector<8x32xf32>
    %80 = arith.divf %79, %78 : vector<8x32xf32>
    %cst_34 = arith.constant dense<0.000000e+00> : vector<8xf32>
    %81 = vector.multi_reduction <add>, %80, %cst_34 [1] : vector<8x32xf32> to vector<8xf32>
    %82 = vector.shape_cast %81 : vector<8xf32> to vector<8x1xf32>
    %cst_35 = arith.constant 1.250000e-01 : f32
    %83 = vector.broadcast %cst_35 : f32 to vector<8x1xf32>
    %84 = arith.mulf %82, %83 : vector<8x1xf32>
    %85 = math.log %78 : vector<8x32xf32>
    %cst_36 = arith.constant dense<0.000000e+00> : vector<8xf32>
    %86 = vector.multi_reduction <add>, %85, %cst_36 [1] : vector<8x32xf32> to vector<8xf32>
    %87 = vector.shape_cast %86 : vector<8xf32> to vector<8x1xf32>
    %88 = arith.addf %50, %54 : vector<8x1xf32>
    %cst_37 = arith.constant 5.000000e-01 : f32
    %89 = vector.broadcast %cst_37 : f32 to vector<8x1xf32>
    %90 = arith.mulf %89, %88 : vector<8x1xf32>
    %91 = arith.subf %87, %90 : vector<8x1xf32>
    %cst_38 = arith.constant 5.000000e-01 : f32
    %92 = vector.broadcast %cst_38 : f32 to vector<8x1xf32>
    %93 = arith.mulf %92, %91 : vector<8x1xf32>
    %94 = arith.addf %84, %93 : vector<8x1xf32>
    %c0_39 = arith.constant 0 : index
    %c0_40 = arith.constant 0 : index
    %95 = vector.load %arg7[%c0_39, %c0_40] : memref<8x1xf32, #tpu.memory_space<vmem>>, vector<8x1xf32>
    %96 = vector.broadcast %5 : i32 to vector<8x1xi32>
    %97 = arith.cmpi slt, %32, %96 : vector<8x1xi32>
    %98 = arith.extui %97 : vector<8x1xi1> to vector<8x1xi32>
    %99 = arith.sitofp %98 : vector<8x1xi32> to vector<8x1xf32>
    %100 = arith.subf %94, %74 : vector<8x1xf32>
    %101 = arith.mulf %100, %95 : vector<8x1xf32>
    %cst_41 = arith.constant 2.000000e-01 : f32
    %102 = vector.broadcast %cst_41 : f32 to vector<8x1xf32>
    %103 = arith.addf %101, %102 : vector<8x1xf32>
    %104 = math.absf %95 : vector<8x1xf32>
    %c0_42 = arith.constant 0 : index
    %c0_43 = arith.constant 0 : index
    %c0_44 = arith.constant 0 : index
    %105 = vector.load %arg9[%c0_42, %c0_43, %c0_44] : memref<1x1x1xf32, #tpu.memory_space<vmem>>, vector<1x1x1xf32>
    %cst_45 = arith.constant 0.000000e+00 : f32
    %106 = vector.broadcast %cst_45 : f32 to vector<8x1xf32>
    %107 = arith.maximumf %103, %106 : vector<8x1xf32>
    %108 = arith.mulf %107, %104 : vector<8x1xf32>
    %109 = arith.mulf %108, %99 : vector<8x1xf32>
    %110 = vector.shape_cast %109 : vector<8x1xf32> to vector<1x8x1xf32>
    %cst_46 = arith.constant dense<0.000000e+00> : vector<1xf32>
    %111 = vector.multi_reduction <add>, %110, %cst_46 [1, 2] : vector<1x8x1xf32> to vector<1xf32>
    %112 = vector.shape_cast %111 : vector<1xf32> to vector<1x1x1xf32>
    %113 = vector.extract %112[0, 0, 0] : f32 from vector<1x1x1xf32>
    %114 = vector.broadcast %113 : f32 to vector<1x1x1xf32>
    %115 = arith.addf %105, %114 : vector<1x1x1xf32>
    %c0_47 = arith.constant 0 : index
    %c0_48 = arith.constant 0 : index
    %c0_49 = arith.constant 0 : index
    %116 = vector.load %arg9[%c0_47, %c0_48, %c0_49] : memref<1x1x1xf32, #tpu.memory_space<vmem>>, vector<1x1x1xf32>
    tpu.vector_store %arg9[%c0_47, %c0_48, %c0_49], %115 {strides = array<i32>} : memref<1x1x1xf32, #tpu.memory_space<vmem>>, vector<1x1x1xf32>,
    %c0_50 = arith.constant 0 : index
    %c0_51 = arith.constant 0 : index
    %c0_52 = arith.constant 0 : index
    %117 = vector.load %arg10[%c0_50, %c0_51, %c0_52] : memref<1x1x1xf32, #tpu.memory_space<vmem>>, vector<1x1x1xf32>
    %cst_53 = arith.constant 0.000000e+00 : f32
    %118 = vector.broadcast %cst_53 : f32 to vector<8x1xf32>
    %119 = arith.cmpf ogt, %103, %118 : vector<8x1xf32>
    %120 = arith.extui %119 : vector<8x1xi1> to vector<8x1xi32>
    %121 = arith.sitofp %120 : vector<8x1xi32> to vector<8x1xf32>
    %122 = arith.mulf %121, %104 : vector<8x1xf32>
    %123 = arith.mulf %122, %99 : vector<8x1xf32>
    %124 = vector.shape_cast %123 : vector<8x1xf32> to vector<1x8x1xf32>
    %cst_54 = arith.constant dense<0.000000e+00> : vector<1xf32>
    %125 = vector.multi_reduction <add>, %124, %cst_54 [1, 2] : vector<1x8x1xf32> to vector<1xf32>
    %126 = vector.shape_cast %125 : vector<1xf32> to vector<1x1x1xf32>
    %127 = vector.extract %126[0, 0, 0] : f32 from vector<1x1x1xf32>
    %128 = vector.broadcast %127 : f32 to vector<1x1x1xf32>
    %129 = arith.addf %117, %128 : vector<1x1x1xf32>
    %c0_55 = arith.constant 0 : index
    %c0_56 = arith.constant 0 : index
    %c0_57 = arith.constant 0 : index
    %130 = vector.load %arg10[%c0_55, %c0_56, %c0_57] : memref<1x1x1xf32, #tpu.memory_space<vmem>>, vector<1x1x1xf32>
    tpu.vector_store %arg10[%c0_55, %c0_56, %c0_57], %129 {strides = array<i32>} : memref<1x1x1xf32, #tpu.memory_space<vmem>>, vector<1x1x1xf32>,
    return
  }
  func.func @transform_0(%arg0: i32, %arg1: i32, %arg2: memref<1xi32, #tpu.memory_space<smem>>) -> (i32, i32) {
    %c1_i32 = arith.constant 1 : i32
    %0 = arith.muli %arg0, %c1_i32 : i32
    %1 = arith.addi %0, %arg1 : i32
    %c0_i32 = arith.constant 0 : i32
    %c0_i32_0 = arith.constant 0 : i32
    return %1, %c0_i32 : i32, i32
  }
  func.func @transform_1(%arg0: i32, %arg1: i32, %arg2: memref<1xi32, #tpu.memory_space<smem>>) -> (i32, i32) {
    %c1_i32 = arith.constant 1 : i32
    %0 = arith.muli %arg0, %c1_i32 : i32
    %1 = arith.addi %0, %arg1 : i32
    %c1_i32_0 = arith.constant 1 : i32
    %2 = arith.addi %1, %c1_i32_0 : i32
    %c1_i32_1 = arith.constant 1 : i32
    %3 = arith.muli %2, %c1_i32_1 : i32
    %c1_i32_2 = arith.constant 1 : i32
    %4 = arith.minsi %3, %c1_i32_2 : i32
    %c0_i32 = arith.constant 0 : i32
    %c0_i32_3 = arith.constant 0 : i32
    return %4, %c0_i32 : i32, i32
  }
  func.func @transform_2(%arg0: i32, %arg1: i32, %arg2: memref<1xi32, #tpu.memory_space<smem>>) -> (i32, i32) {
    %c0_i32 = arith.constant 0 : i32
    %c0_i32_0 = arith.constant 0 : i32
    %c0_i32_1 = arith.constant 0 : i32
    return %c0_i32, %c0_i32_0 : i32, i32
  }
  func.func @transform_3(%arg0: i32, %arg1: i32, %arg2: memref<1xi32, #tpu.memory_space<smem>>) -> (i32, i32) {
    %c1_i32 = arith.constant 1 : i32
    %0 = arith.muli %arg0, %c1_i32 : i32
    %1 = arith.addi %0, %arg1 : i32
    %c0_i32 = arith.constant 0 : i32
    %c0_i32_0 = arith.constant 0 : i32
    return %1, %c0_i32 : i32, i32
  }
  func.func @transform_4(%arg0: i32, %arg1: i32, %arg2: memref<1xi32, #tpu.memory_space<smem>>) -> (i32, i32) {
    %c1_i32 = arith.constant 1 : i32
    %0 = arith.muli %arg0, %c1_i32 : i32
    %1 = arith.addi %0, %arg1 : i32
    %c0_i32 = arith.constant 0 : i32
    %c0_i32_0 = arith.constant 0 : i32
    return %1, %c0_i32 : i32, i32
  }
  func.func @transform_5(%arg0: i32, %arg1: i32, %arg2: memref<1xi32, #tpu.memory_space<smem>>) -> (i32, i32, i32) {
    %c0_i32 = arith.constant 0 : i32
    %c0_i32_0 = arith.constant 0 : i32
    %c0_i32_1 = arith.constant 0 : i32
    return %arg0, %c0_i32, %c0_i32_0 : i32, i32, i32
  }
  func.func @transform_6(%arg0: i32, %arg1: i32, %arg2: memref<1xi32, #tpu.memory_space<smem>>) -> (i32, i32, i32) {
    %c0_i32 = arith.constant 0 : i32
    %c0_i32_0 = arith.constant 0 : i32
    %c0_i32_1 = arith.constant 0 : i32
    return %arg0, %c0_i32, %c0_i32_0 : i32, i32, i32
  }
  func.func @transform_7(%arg0: i32, %arg1: i32, %arg2: memref<1xi32, #tpu.memory_space<smem>>) -> (i32, i32, i32) {
    %c0_i32 = arith.constant 0 : i32
    %c0_i32_0 = arith.constant 0 : i32
    %c0_i32_1 = arith.constant 0 : i32
    return %arg0, %c0_i32, %c0_i32_0 : i32, i32, i32
  }
}

</mosaic_0001>

<llo_original>
// kernel: prob_ordi_loss_forward.1
$region0: #{prob_ordi_loss_forward.1}
  #allocation0 [shape = 'u32[]', space=smem, size = 0x4, offset = 0x4, fixed_abs, tag = 'smem constant byte address 0x4 - core index']
  #allocation1 [shape = 'u32[144,128]{1,0:T(1,128)}', space=vmem, size = 0x12000, scoped, tag = 'internal scratch']
  #allocation2 [shape = 'f32[8,64]{1,0:T(8,128)}', space=vmem, size = 0x1000, scoped, tag = 'scratch operand']
  #allocation3 [shape = 's32[1]{0}', space=sflag, size = 0x4, scoped, tag = 'scoped memory for prob_ordi_loss_forward.1']
  #allocation4 [shape = 's32[1]{0:T(128)S(6)}', space=smem, size = 0x200, scoped, tag = 'prefetched SMEM operand 0']
  %s0 = inlined_call_operand.<no memory space> [shape: s32[1], index: 0, kind: input, shape index: {}]
  %s1 = inlined_call_operand.hbm [shape: f32[16,64], index: 1, kind: input, shape index: {}, may-alias: {1,2,3}]
  %s2 = inlined_call_operand.hbm [shape: f32[16,64], index: 2, kind: input, shape index: {}, may-alias: {1,2,3}]
  %s3 = inlined_call_operand.hbm [shape: f32[16,64], index: 3, kind: input, shape index: {}, may-alias: {1,2,3}]
  %s4 = inlined_call_operand.hbm [shape: f32[16,64], index: 4, kind: input, shape index: {}]
  %s5 = inlined_call_operand.hbm [shape: f32[16,1], index: 5, kind: input, shape index: {}]
  %s6 = inlined_call_operand.hbm [shape: f32[2,1,1], index: 6, kind: output, shape index: {0}]
  %s7 = inlined_call_operand.hbm [shape: f32[2,1,1], index: 7, kind: output, shape index: {1}]
  %s8 = inlined_call_operand.hbm [shape: f32[2,1,1], index: 8, kind: output, shape index: {2}]
  %9 = xla_tuple %s6, %s7, %s8
  %s10 = sld [smem:[#allocation0]]
  $region93: #{prob_ordi_loss_forward.1} parent=0
    _
  %s12 = ssub.s32 1, %s10
  %s13 = scalar_select 0, %s12, %s10
  %14 = sst [smem:[#allocation4]] %s0
  $region1: #{prob_ordi_loss_forward.1} parent=0
    #allocation5 [shape = 'u8[8192]{0}', space=vmem, size = 0x2000, scoped, tag = 'input window, operand 1']
    #allocation6 [shape = 's32[2]{0}', space=sflag, size = 0x8, scoped, tag = 'scoped memory for prob_ordi_loss_forward.1']
    #allocation7 [shape = 's32[2]{0}', space=sflag, size = 0x8, scoped, tag = 'scoped memory for prob_ordi_loss_forward.1']
    #allocation8 [shape = 'u8[8192]{0}', space=vmem, size = 0x2000, scoped, tag = 'input window, operand 2']
    #allocation9 [shape = 's32[2]{0}', space=sflag, size = 0x8, scoped, tag = 'scoped memory for prob_ordi_loss_forward.1']
    #allocation10 [shape = 'u8[4096]{0}', space=vmem, size = 0x1000, scoped, tag = 'input window, operand 3, single buffered']
    #allocation11 [shape = 'u8[8192]{0}', space=vmem, size = 0x2000, scoped, tag = 'input window, operand 4']
    #allocation12 [shape = 's32[2]{0}', space=sflag, size = 0x8, scoped, tag = 'scoped memory for prob_ordi_loss_forward.1']
    #allocation13 [shape = 'u8[8192]{0}', space=vmem, size = 0x2000, scoped, tag = 'input window, operand 5']
    #allocation14 [shape = 'u8[1024]{0}', space=vmem, size = 0x400, scoped, tag = 'output window, operand 0']
    #allocation15 [shape = 'u8[1024]{0}', space=vmem, size = 0x400, scoped, tag = 'output window, operand 1']
    #allocation16 [shape = 's32[2]{0}', space=sflag, size = 0x8, scoped, tag = 'scoped memory for prob_ordi_loss_forward.1']
    #allocation17 [shape = 'u8[1024]{0}', space=vmem, size = 0x400, scoped, tag = 'output window, operand 2']
    %15 = vsyncpa [#allocation6], 0
    %s16 = scalar_lea.sflag [#allocation6], 1
    %17 = vsyncpa %s16, 0
    %18 = vsyncpa [#allocation9], 0
    %s19 = scalar_lea.sflag [#allocation9], 1
    %20 = vsyncpa %s19, 0
    %21 = vsyncpa [#allocation12], 0
    %s22 = scalar_lea.sflag [#allocation12], 1
    %23 = vsyncpa %s22, 0
    %24 = vsyncpa [#allocation7], 0
    %s25 = scalar_lea.sflag [#allocation7], 1
    %26 = vsyncpa %s25, 0
    %27 = vsyncpa [#allocation16], 0
    %s28 = scalar_lea.sflag [#allocation16], 1
    %29 = vsyncpa %s28, 0
    loop: start=0, step=1, limit=4
    $region2: #{prob_ordi_loss_forward.1} parent=1 // loop_pre_header
      _
    $region3: #{prob_ordi_loss_forward.1} parent=1 // loop_header
      %s31 = sphi 0, %s35
      %p32 = scmp.ge.s32.totalorder %s31, 4
      %s38 = sphi 0, %s50
      %s39 = sphi 0, %s46
      %s40 = sphi 0, %s38
      %s41 = sphi 0, %s39
      %s42 = sphi 0, %s40
      %s43 = sphi 0, %s41
      %s55 = sphi 0, %s57
      %s58 = sphi 0, %s55
      %s59 = sphi 0, %s58
      %s75 = sphi 0, %s59
      %s89 = sphi 0, %s91
      %s92 = sphi 0, %s89
      %s93 = sphi 0, %s92
      %s109 = sphi 0, %s93
      %s113 = sphi 0, %s113
      %s115 = sphi 0, %s113
      %s116 = sphi 0, %s115
      %s130 = sphi 0, %s116
      %s138 = sphi 0, %s140
      %s141 = sphi 0, %s138
      %s142 = sphi 0, %s141
      %s158 = sphi 0, %s142
      %s166 = sphi 0, %s168
      %s169 = sphi 0, %s166
      %s170 = sphi 0, %s169
      %s186 = sphi 0, %s170
      %s192 = sphi 0, %s194
      %s195 = sphi 0, %s192
      %s196 = sphi 0, %s195
      %s212 = sphi 0, %s196
      %s218 = sphi 0, %s220
      %s221 = sphi 0, %s218
      %s222 = sphi 0, %s221
      %s238 = sphi 0, %s222
      %s244 = sphi 0, %s246
      %s247 = sphi 0, %s244
      %s248 = sphi 0, %s247
      %s264 = sphi 0, %s248
    $region4: #{prob_ordi_loss_forward.1} parent=1 // loop_header_branch
      %34 = sbr.rel (%p32) target = $region8
    $region5: #{prob_ordi_loss_forward.1} parent=1 // loop_body
      %s36 = ssub.s32 %s31, 1
      %s37 = ssub.s32 %s31, 2
      %s44 = sadd.s32 1, %s39
      %p45 = scmp.ge.s32.totalorder %s44, 1
      %s46 = scalar_select %p45, 0, %s44
      %s47 = sadd.s32 1, %s38
      %s48 = scalar_select %p45, %s47, %s38
      %p49 = scmp.ge.s32.totalorder %s48, 2
      %s50 = scalar_select %p49, 0, %s48
      %s51 = sadd.s32 %s38, %s39
      %s52 = sadd.s32 %s50, %s46
      %s53 = ssub.s32 %s51, %s52
      %p54 = scmp.eq.s32.totalorder %s53, 0
      %s56 = sadd.s32 %s55, 1
      %s57 = scalar_select %p54, %s55, %s56
      %p60 = pneg %p54
      %p61 = scmp.eq.s32.totalorder %s31, 1
      %p62 = por %p60, %p61
      %p63 = scmp.ne.s32.totalorder %s55, %s58
      %p64 = scmp.eq.s32.totalorder %s31, 0
      %p65 = por %p63, %p64
      %p66 = scmp.ne.s32.totalorder %s55, %s58
      %p67 = scmp.eq.s32.totalorder %s36, 1
      %p68 = por %p66, %p67
      %p69 = scmp.ne.s32.totalorder %s58, %s59
      %p70 = scmp.eq.s32.totalorder %s36, 0
      %p71 = por %p69, %p70
      %p72 = scmp.ne.s32.totalorder %s58, %s59
      %p73 = scmp.eq.s32.totalorder %s37, 1
      %p74 = por %p72, %p73
      %p76 = scmp.ne.s32.totalorder %s59, %s75
      %p77 = scmp.eq.s32.totalorder %s37, 0
      %p78 = por %p76, %p77
      %s79 = sadd.s32 %s38, %s39
      %s80 = sadd.s32 %s79, 1
      %p81 = scmp.lt.s32.totalorder %s80, 1
      %s82 = scalar_select %p81, %s80, 1
      %s83 = sadd.s32 %s50, %s46
      %s84 = sadd.s32 %s83, 1
      %p85 = scmp.lt.s32.totalorder %s84, 1
      %s86 = scalar_select %p85, %s84, 1
      %s87 = ssub.s32 %s82, %s86
      %p88 = scmp.eq.s32.totalorder %s87, 0
      %s90 = sadd.s32 %s89, 1
      %s91 = scalar_select %p88, %s89, %s90
      %p94 = pneg %p88
      %p95 = scmp.eq.s32.totalorder %s31, 1
      %p96 = por %p94, %p95
      %p97 = scmp.ne.s32.totalorder %s89, %s92
      %p98 = scmp.eq.s32.totalorder %s31, 0
      %p99 = por %p97, %p98
      %p100 = scmp.ne.s32.totalorder %s89, %s92
      %p101 = scmp.eq.s32.totalorder %s36, 1
      %p102 = por %p100, %p101
      %p103 = scmp.ne.s32.totalorder %s92, %s93
      %p104 = scmp.eq.s32.totalorder %s36, 0
      %p105 = por %p103, %p104
      %p106 = scmp.ne.s32.totalorder %s92, %s93
      %p107 = scmp.eq.s32.totalorder %s37, 1
      %p108 = por %p106, %p107
      %p110 = scmp.ne.s32.totalorder %s93, %s109
      %p111 = scmp.eq.s32.totalorder %s37, 0
      %p112 = por %p110, %p111
      %s114 = sadd.s32 %s113, 1
      %p117 = scmp.eq.s32.totalorder %s31, 1
      %p118 = scmp.ne.s32.totalorder %s113, %s115
      %p119 = scmp.eq.s32.totalorder %s31, 0
      %p120 = por %p118, %p119
      %p121 = scmp.ne.s32.totalorder %s113, %s115
      %p122 = scmp.eq.s32.totalorder %s36, 1
      %p123 = por %p121, %p122
      %p124 = scmp.ne.s32.totalorder %s115, %s116
      %p125 = scmp.eq.s32.totalorder %s36, 0
      %p126 = por %p124, %p125
      %p127 = scmp.ne.s32.totalorder %s115, %s116
      %p128 = scmp.eq.s32.totalorder %s37, 1
      %p129 = por %p127, %p128
      %p131 = scmp.ne.s32.totalorder %s116, %s130
      %p132 = scmp.eq.s32.totalorder %s37, 0
      %p133 = por %p131, %p132
      %s134 = sadd.s32 %s38, %s39
      %s135 = sadd.s32 %s50, %s46
      %s136 = ssub.s32 %s134, %s135
      %p137 = scmp.eq.s32.totalorder %s136, 0
      %s139 = sadd.s32 %s138, 1
      %s140 = scalar_select %p137, %s138, %s139
      %p143 = pneg %p137
      %p144 = scmp.eq.s32.totalorder %s31, 1
      %p145 = por %p143, %p144
      %p146 = scmp.ne.s32.totalorder %s138, %s141
      %p147 = scmp.eq.s32.totalorder %s31, 0
      %p148 = por %p146, %p147
      %p149 = scmp.ne.s32.totalorder %s138, %s141
      %p150 = scmp.eq.s32.totalorder %s36, 1
      %p151 = por %p149, %p150
      %p152 = scmp.ne.s32.totalorder %s141, %s142
      %p153 = scmp.eq.s32.totalorder %s36, 0
      %p154 = por %p152, %p153
      %p155 = scmp.ne.s32.totalorder %s141, %s142
      %p156 = scmp.eq.s32.totalorder %s37, 1
      %p157 = por %p155, %p156
      %p159 = scmp.ne.s32.totalorder %s142, %s158
      %p160 = scmp.eq.s32.totalorder %s37, 0
      %p161 = por %p159, %p160
      %s162 = sadd.s32 %s38, %s39
      %s163 = sadd.s32 %s50, %s46
      %s164 = ssub.s32 %s162, %s163
      %p165 = scmp.eq.s32.totalorder %s164, 0
      %s167 = sadd.s32 %s166, 1
      %s168 = scalar_select %p165, %s166, %s167
      %p171 = pneg %p165
      %p172 = scmp.eq.s32.totalorder %s31, 1
      %p173 = por %p171, %p172
      %p174 = scmp.ne.s32.totalorder %s166, %s169
      %p175 = scmp.eq.s32.totalorder %s31, 0
      %p176 = por %p174, %p175
      %p177 = scmp.ne.s32.totalorder %s166, %s169
      %p178 = scmp.eq.s32.totalorder %s36, 1
      %p179 = por %p177, %p178
      %p180 = scmp.ne.s32.totalorder %s169, %s170
      %p181 = scmp.eq.s32.totalorder %s36, 0
      %p182 = por %p180, %p181
      %p183 = scmp.ne.s32.totalorder %s169, %s170
      %p184 = scmp.eq.s32.totalorder %s37, 1
      %p185 = por %p183, %p184
      %p187 = scmp.ne.s32.totalorder %s170, %s186
      %p188 = scmp.eq.s32.totalorder %s37, 0
      %p189 = por %p187, %p188
      %s190 = ssub.s32 %s38, %s50
      %p191 = scmp.eq.s32.totalorder %s190, 0
      %s193 = sadd.s32 %s192, 1
      %s194 = scalar_select %p191, %s192, %s193
      %p197 = pneg %p191
      %p198 = scmp.eq.s32.totalorder %s31, 1
      %p199 = por %p197, %p198
      %p200 = scmp.ne.s32.totalorder %s192, %s195
      %p201 = scmp.eq.s32.totalorder %s31, 0
      %p202 = por %p200, %p201
      %p203 = scmp.ne.s32.totalorder %s192, %s195
      %p204 = scmp.eq.s32.totalorder %s36, 1
      %p205 = por %p203, %p204
      %p206 = scmp.ne.s32.totalorder %s195, %s196
      %p207 = scmp.eq.s32.totalorder %s36, 0
      %p208 = por %p206, %p207
      %p209 = scmp.ne.s32.totalorder %s195, %s196
      %p210 = scmp.eq.s32.totalorder %s37, 1
      %p211 = por %p209, %p210
      %p213 = scmp.ne.s32.totalorder %s196, %s212
      %p214 = scmp.eq.s32.totalorder %s37, 0
      %p215 = por %p213, %p214
      %s216 = ssub.s32 %s38, %s50
      %p217 = scmp.eq.s32.totalorder %s216, 0
      %s219 = sadd.s32 %s218, 1
      %s220 = scalar_select %p217, %s218, %s219
      %p223 = pneg %p217
      %p224 = scmp.eq.s32.totalorder %s31, 1
      %p225 = por %p223, %p224
      %p226 = scmp.ne.s32.totalorder %s218, %s221
      %p227 = scmp.eq.s32.totalorder %s31, 0
      %p228 = por %p226, %p227
      %p229 = scmp.ne.s32.totalorder %s218, %s221
      %p230 = scmp.eq.s32.totalorder %s36, 1
      %p231 = por %p229, %p230
      %p232 = scmp.ne.s32.totalorder %s221, %s222
      %p233 = scmp.eq.s32.totalorder %s36, 0
      %p234 = por %p232, %p233
      %p235 = scmp.ne.s32.totalorder %s221, %s222
      %p236 = scmp.eq.s32.totalorder %s37, 1
      %p237 = por %p235, %p236
      %p239 = scmp.ne.s32.totalorder %s222, %s238
      %p240 = scmp.eq.s32.totalorder %s37, 0
      %p241 = por %p239, %p240
      %s242 = ssub.s32 %s38, %s50
      %p243 = scmp.eq.s32.totalorder %s242, 0
      %s245 = sadd.s32 %s244, 1
      %s246 = scalar_select %p243, %s244, %s245
      %p249 = pneg %p243
      %p250 = scmp.eq.s32.totalorder %s31, 1
      %p251 = por %p249, %p250
      %p252 = scmp.ne.s32.totalorder %s244, %s247
      %p253 = scmp.eq.s32.totalorder %s31, 0
      %p254 = por %p252, %p253
      %p255 = scmp.ne.s32.totalorder %s244, %s247
      %p256 = scmp.eq.s32.totalorder %s36, 1
      %p257 = por %p255, %p256
      %p258 = scmp.ne.s32.totalorder %s247, %s248
      %p259 = scmp.eq.s32.totalorder %s36, 0
      %p260 = por %p258, %p259
      %p261 = scmp.ne.s32.totalorder %s247, %s248
      %p262 = scmp.eq.s32.totalorder %s37, 1
      %p263 = por %p261, %p262
      %p265 = scmp.ne.s32.totalorder %s248, %s264
      %p266 = scmp.eq.s32.totalorder %s37, 0
      %p267 = por %p265, %p266
      %p268 = scmp.le.s32.totalorder 1, %s31
      %p269 = scmp.lt.s32.totalorder %s31, 3
      %p270 = pnand %p268, %p269
      %p271 = pneg %p270
      // Predicated region
      $region9: #{prob_ordi_loss_forward.1} parent=5 // pred_check
        _
      $region10: #{prob_ordi_loss_forward.1} parent=5 // pred_check_branch
        %273 = sbr.rel (%p270) target = $region12
      $region11: #{prob_ordi_loss_forward.1} parent=5 // pred_region
        %s274 = ssub.s32 %s31, 1
        // Predicated region
        $region13: #{prob_ordi_loss_forward.1} parent=11 // pred_check
          %p275 = pneg %p126
        $region14: #{prob_ordi_loss_forward.1} parent=11 // pred_check_branch
          %277 = sbr.rel (%p275) target = $region16
        $region15: #{prob_ordi_loss_forward.1} parent=11 // pred_region
          %s279 = ssub.s32 128, 128
          %280 = vsyncadd [#allocation9], %s279
          %s282 = sshll.u32 [#allocation10], 4
          %s283 = int_to_ptr.vmem [resolvable:$true] %s282
          %285 = dma.hbm_to_vmem [thread:$0]  %s3, 128, %s283, [#allocation9]
        $region16: #{prob_ordi_loss_forward.1} parent=11 // pred_fallthru
          _
      $region12: #{prob_ordi_loss_forward.1} parent=5 // pred_fallthru
        _
      %p286 = scmp.lt.s32.totalorder %s31, 2
      // Predicated region
      $region17: #{prob_ordi_loss_forward.1} parent=5 // pred_check
        %p287 = pneg %p286
      $region18: #{prob_ordi_loss_forward.1} parent=5 // pred_check_branch
        %289 = sbr.rel (%p287) target = $region20
      $region19: #{prob_ordi_loss_forward.1} parent=5 // pred_region
        // Predicated region
        $region21: #{prob_ordi_loss_forward.1} parent=19 // pred_check
          %p290 = pneg %p65
        $region22: #{prob_ordi_loss_forward.1} parent=19 // pred_check_branch
          %292 = sbr.rel (%p290) target = $region24
        $region23: #{prob_ordi_loss_forward.1} parent=19 // pred_region
          %s293 = sand.u32 %s55, 1
          %s294 = scalar_lea.sflag [#allocation6], %s293
          %s295 = sand.u32 %s55, 1
          %s296 = smul.addr %s295, 8
          %s297 = scalar_lea.vmem [#allocation5], %s296
          %s298 = sadd.s32 %s38, %s39
          %s300 = ssub.s32 128, 128
          %301 = vsyncadd %s294, %s300
          %s302 = smul.addr %s298, 128
          %s303 = scalar_lea.hbm %s1, %s302
          %s305 = sshll.u32 %s297, 4
          %s306 = int_to_ptr.vmem [resolvable:$true] %s305
          %308 = dma.hbm_to_vmem [thread:$0]  %s303, 128, %s306, %s294
        $region24: #{prob_ordi_loss_forward.1} parent=19 // pred_fallthru
          _
        // Predicated region
        $region25: #{prob_ordi_loss_forward.1} parent=19 // pred_check
          %p309 = pneg %p99
        $region26: #{prob_ordi_loss_forward.1} parent=19 // pred_check_branch
          %311 = sbr.rel (%p309) target = $region28
        $region27: #{prob_ordi_loss_forward.1} parent=19 // pred_region
          %s312 = sand.u32 %s31, 1
          %s313 = scalar_lea.sflag [#allocation9], %s312
          %s314 = sand.u32 %s89, 1
          %s315 = smul.addr %s314, 8
          %s316 = scalar_lea.vmem [#allocation8], %s315
          %s317 = sadd.s32 %s38, %s39
          %s318 = sadd.s32 %s317, 1
          %p319 = scmp.lt.s32.totalorder %s318, 1
          %s320 = scalar_select %p319, %s318, 1
          %s322 = ssub.s32 128, 128
          %323 = vsyncadd %s313, %s322
          %s324 = smul.addr %s320, 128
          %s325 = scalar_lea.hbm %s2, %s324
          %s327 = sshll.u32 %s316, 4
          %s328 = int_to_ptr.vmem [resolvable:$true] %s327
          %330 = dma.hbm_to_vmem [thread:$0]  %s325, 128, %s328, %s313
        $region28: #{prob_ordi_loss_forward.1} parent=19 // pred_fallthru
          _
        // Predicated region
        $region29: #{prob_ordi_loss_forward.1} parent=19 // pred_check
          %p331 = pneg %p148
        $region30: #{prob_ordi_loss_forward.1} parent=19 // pred_check_branch
          %333 = sbr.rel (%p331) target = $region32
        $region31: #{prob_ordi_loss_forward.1} parent=19 // pred_region
          %s334 = sand.u32 %s31, 1
          %s335 = scalar_lea.sflag [#allocation12], %s334
          %s336 = sand.u32 %s138, 1
          %s337 = smul.addr %s336, 8
          %s338 = scalar_lea.vmem [#allocation11], %s337
          %s339 = sadd.s32 %s38, %s39
          %s341 = ssub.s32 128, 128
          %342 = vsyncadd %s335, %s341
          %s343 = smul.addr %s339, 128
          %s344 = scalar_lea.hbm %s4, %s343
          %s346 = sshll.u32 %s338, 4
          %s347 = int_to_ptr.vmem [resolvable:$true] %s346
          %349 = dma.hbm_to_vmem [thread:$0]  %s344, 128, %s347, %s335
        $region32: #{prob_ordi_loss_forward.1} parent=19 // pred_fallthru
          _
        // Predicated region
        $region33: #{prob_ordi_loss_forward.1} parent=19 // pred_check
          %p350 = pneg %p176
        $region34: #{prob_ordi_loss_forward.1} parent=19 // pred_check_branch
          %352 = sbr.rel (%p350) target = $region36
        $region35: #{prob_ordi_loss_forward.1} parent=19 // pred_region
          %s353 = sand.u32 %s31, 1
          %s354 = scalar_lea.sflag [#allocation12], %s353
          %s355 = sand.u32 %s166, 1
          %s356 = smul.addr %s355, 8
          %s357 = scalar_lea.vmem [#allocation13], %s356
          %s358 = sadd.s32 %s38, %s39
          %s360 = ssub.s32 128, 128
          %361 = vsyncadd %s354, %s360
          %s362 = smul.addr %s358, 128
          %s363 = scalar_lea.hbm %s5, %s362
          %s365 = sshll.u32 %s357, 4
          %s366 = int_to_ptr.vmem [resolvable:$true] %s365
          %368 = dma.hbm_to_vmem [thread:$0]  %s363, 128, %s366, %s354
        $region36: #{prob_ordi_loss_forward.1} parent=19 // pred_fallthru
          _
      $region20: #{prob_ordi_loss_forward.1} parent=5 // pred_fallthru
        _
      %p369 = scmp.le.s32.totalorder 1, %s31
      %p370 = scmp.lt.s32.totalorder %s31, 3
      %p371 = pnand %p369, %p370
      %p372 = pneg %p371
      // Predicated region
      $region37: #{prob_ordi_loss_forward.1} parent=5 // pred_check
        _
      $region38: #{prob_ordi_loss_forward.1} parent=5 // pred_check_branch
        %374 = sbr.rel (%p371) target = $region40
      $region39: #{prob_ordi_loss_forward.1} parent=5 // pred_region
        %s375 = ssub.s32 %s31, 1
        %s376 = sand.u32 %s58, 1
        %s377 = scalar_lea.sflag [#allocation6], %s376
        %s378 = sand.u32 %s58, 1
        %s379 = smul.addr %s378, 8
        %s380 = scalar_lea.vmem [#allocation5], %s379
        // Predicated region
        $region41: #{prob_ordi_loss_forward.1} parent=39 // pred_check
          %p381 = pneg %p71
        $region42: #{prob_ordi_loss_forward.1} parent=39 // pred_check_branch
          %383 = sbr.rel (%p381) target = $region44
        $region43: #{prob_ordi_loss_forward.1} parent=39 // pred_region
          %384 = dma.done %s377, 128
        $region44: #{prob_ordi_loss_forward.1} parent=39 // pred_fallthru
          _
        %s385 = sand.u32 %s36, 1
        %s386 = scalar_lea.sflag [#allocation9], %s385
        %s387 = sand.u32 %s92, 1
        %s388 = smul.addr %s387, 8
        %s389 = scalar_lea.vmem [#allocation8], %s388
        // Predicated region
        $region45: #{prob_ordi_loss_forward.1} parent=39 // pred_check
          %p390 = pneg %p105
        $region46: #{prob_ordi_loss_forward.1} parent=39 // pred_check_branch
          %392 = sbr.rel (%p390) target = $region48
        $region47: #{prob_ordi_loss_forward.1} parent=39 // pred_region
          %393 = dma.done %s386, 128
        $region48: #{prob_ordi_loss_forward.1} parent=39 // pred_fallthru
          _
        // Predicated region
        $region49: #{prob_ordi_loss_forward.1} parent=39 // pred_check
          %p394 = pneg %p126
        $region50: #{prob_ordi_loss_forward.1} parent=39 // pred_check_branch
          %396 = sbr.rel (%p394) target = $region52
        $region51: #{prob_ordi_loss_forward.1} parent=39 // pred_region
          %397 = dma.done [#allocation9], 128
        $region52: #{prob_ordi_loss_forward.1} parent=39 // pred_fallthru
          _
        %s398 = sand.u32 %s36, 1
        %s399 = scalar_lea.sflag [#allocation12], %s398
        %s400 = sand.u32 %s141, 1
        %s401 = smul.addr %s400, 8
        %s402 = scalar_lea.vmem [#allocation11], %s401
        // Predicated region
        $region53: #{prob_ordi_loss_forward.1} parent=39 // pred_check
          %p403 = pneg %p154
        $region54: #{prob_ordi_loss_forward.1} parent=39 // pred_check_branch
          %405 = sbr.rel (%p403) target = $region56
        $region55: #{prob_ordi_loss_forward.1} parent=39 // pred_region
          %406 = dma.done %s399, 128
        $region56: #{prob_ordi_loss_forward.1} parent=39 // pred_fallthru
          _
        %s407 = sand.u32 %s36, 1
        %s408 = scalar_lea.sflag [#allocation12], %s407
        %s409 = sand.u32 %s169, 1
        %s410 = smul.addr %s409, 8
        %s411 = scalar_lea.vmem [#allocation13], %s410
        // Predicated region
        $region57: #{prob_ordi_loss_forward.1} parent=39 // pred_check
          %p412 = pneg %p182
        $region58: #{prob_ordi_loss_forward.1} parent=39 // pred_check_branch
          %414 = sbr.rel (%p412) target = $region60
        $region59: #{prob_ordi_loss_forward.1} parent=39 // pred_region
          %415 = dma.done %s408, 128
        $region60: #{prob_ordi_loss_forward.1} parent=39 // pred_fallthru
          _
        %s416 = sand.u32 %s58, 1
        %s417 = scalar_lea.sflag [#allocation6], %s416
        %s418 = sand.u32 %s58, 1
        %s419 = smul.addr %s418, 8
        %s420 = scalar_lea.vmem [#allocation5], %s419
        %p421 = pneg %p71
        %p422 = pneg %p68
        %s423 = sand.u32 %s36, 1
        %s424 = scalar_lea.sflag [#allocation9], %s423
        %s425 = sand.u32 %s92, 1
        %s426 = smul.addr %s425, 8
        %s427 = scalar_lea.vmem [#allocation8], %s426
        %p428 = pneg %p105
        %p429 = pneg %p102
        %p430 = pneg %p126
        %p431 = pneg %p123
        %s432 = sand.u32 %s36, 1
        %s433 = scalar_lea.sflag [#allocation12], %s432
        %s434 = sand.u32 %s141, 1
        %s435 = smul.addr %s434, 8
        %s436 = scalar_lea.vmem [#allocation11], %s435
        %p437 = pneg %p154
        %p438 = pneg %p151
        %s439 = sand.u32 %s36, 1
        %s440 = scalar_lea.sflag [#allocation12], %s439
        %s441 = sand.u32 %s169, 1
        %s442 = smul.addr %s441, 8
        %s443 = scalar_lea.vmem [#allocation13], %s442
        %p444 = pneg %p182
        %p445 = pneg %p179
        %p446 = pneg %p208
        %p447 = pneg %p205
        %s448 = sand.u32 %s195, 1
        %s449 = scalar_lea.sflag [#allocation7], %s448
        %s450 = sand.u32 %s195, 1
        %s451 = scalar_lea.vmem [#allocation14], %s450
        %p452 = pneg %p234
        %p453 = pneg %p231
        %s454 = sand.u32 %s36, 1
        %s455 = scalar_lea.sflag [#allocation16], %s454
        %s456 = sand.u32 %s221, 1
        %s457 = scalar_lea.vmem [#allocation15], %s456
        %p458 = pneg %p260
        %p459 = pneg %p257
        %s460 = sand.u32 %s36, 1
        %s461 = scalar_lea.sflag [#allocation16], %s460
        %s462 = sand.u32 %s247, 1
        %s463 = scalar_lea.vmem [#allocation17], %s462
        %s464 = sadd.s32 %s40, %s41
        %s465 = sadd.s32 %s40, %s41
        %s466 = sadd.s32 %s465, 1
        %p467 = scmp.lt.s32.totalorder %s466, 1
        %s468 = scalar_select %p467, %s466, 1
        %s469 = sadd.s32 %s40, %s41
        %s470 = sadd.s32 %s40, %s41
        %s471 = sadd.s32 %s40, %s41
        %p472 = scmp.eq.s32.totalorder %s41, 0
        // Predicated region
        $region61: #{prob_ordi_loss_forward.1} parent=39 // pred_check
          %p473 = pneg %p472
        $region62: #{prob_ordi_loss_forward.1} parent=39 // pred_check_branch
          %475 = sbr.rel (%p473) target = $region64
        $region63: #{prob_ordi_loss_forward.1} parent=39 // pred_region
          %vm476 = vcmask 0
          %477 = vst.msk [vmem:[%s451] sm:$0x1] %vm476, 0.0
          %478 = vst.msk [vmem:[%s457] sm:$0x1] %vm476, 0.0
          %479 = vst.msk [vmem:[%s463] sm:$0x1] %vm476, 0.0
        $region64: #{prob_ordi_loss_forward.1} parent=39 // pred_fallthru
          _
        %s480 = sld [smem:[#allocation4]]
        %v481 = vld [vmem:[%s380] sm:$0xff]
        %v482 = vmul.f32 %v481, 1.442695
        %v483 = vpow.pop %v482
        %v484 = vld [vmem:[%s451] sm:$0x1]
        %v485 = vmul.f32 %v481, %v481
        %487 = vrot.lane.b32.xlu0 %v483, 96
        %v488 = vpop.permute.xlu0 %487
        %v490 = vadd.f32 %v485, %v488
        %492 = vrot.lane.b32.xlu0 %v481, 96
        %v493 = vpop.permute.xlu0 %492
        %v495 = vsub.f32 %v490, %v493
        %v496 = vsub.f32 %v495, 1.0
        %vm497 = vcmask 261120
        %v498 = vsel %vm497, %v496, 0.0
        %499 = vadd.xlane.f32.xlu0 %v498
        %v500 = vpop.xlane.xlu0 %499
        %v501 = vrot.slane %v500, 4
        %v502 = vadd.f32 %v500, %v501
        %v503 = vrot.slane %v502, 2
        %v504 = vadd.f32 %v502, %v503
        %v505 = vrot.slane %v504, 1
        %v506 = vadd.f32 %v504, %v505
        %s507 = vtos %v506
        %s508 = smul.f32 %s507, 0.5
        %v509 = vstv %s508
        %v510 = vadd.f32 %v484, %v509
        %vm511 = vcmask 0
        %512 = vst.msk [vmem:[%s451] sm:$0x1] %vm511, %v510
        %v513 = vld [vmem:[%s380 + $0x1] sm:$0x7f]
        %vm514 = vcmask 522240
        %515 = vst.msk [vmem:[#allocation2] sm:$0x7f] %vm514, %v513
        %v516 = vld [vmem:[%s389] sm:$0x1]
        %vm517 = vcmask 516096
        %518 = vst.msk [vmem:[#allocation2 + $0x7] sm:$0x1] %vm517, %v516
        %v519 = vld [vmem:[#allocation2] sm:$0xff]
        %s520 = smul.u32 %s471, 8
        %v521 = vlaneseq
        %v522 = vshrl.u32 %v521, 7
        %v523 = vstv %s520
        %v524 = vadd.s32 %v523, %v522
        %v525 = vld [vmem:[#allocation10] sm:$0x1]
        %s526 = ssub.s32 %s480, 1
        %v527 = vstv %s526
        %vm528 = vcmp.eq.s32.totalorder %v524, %v527
        %v529 = vsel %vm528, 1, 0
        %vm530 = vcmp.eq.s32.totalorder %v529, 1
        %v531 = vlaneseq
        %v532 = vshrl.u32 %v531, 7
        %v533 = vsub.s32 0, %v532
        %v534 = vrot.slane %v525, %v533
        %v535 = vsel %vm530, %v534, %v519
        %v536 = vmul.f32 %v535, 1.442695
        %v537 = vpow.pop %v536
        %v538 = vld [vmem:[%s402] sm:$0xff]
        %v539 = vmul.f32 %v538, 1.442695
        %v540 = vpow.pop %v539
        %v541 = vsel %vm497, %v493, 0.0
        %542 = vadd.xlane.f32.xlu0 %v541
        %v543 = vpop.xlane.xlu0 %542
        %545 = vrot.lane.b32.xlu0 %v535, 96
        %v546 = vpop.permute.xlu0 %545
        %v548 = vsel %vm497, %v546, 0.0
        %549 = vadd.xlane.f32.xlu0 %v548
        %v550 = vpop.xlane.xlu0 %549
        %552 = vrot.lane.b32.xlu0 %v538, 96
        %v553 = vpop.permute.xlu0 %552
        %v555 = vsel %vm497, %v553, 0.0
        %556 = vadd.xlane.f32.xlu0 %v555
        %v557 = vpop.xlane.xlu0 %556
        %v558 = vsub.f32 %v481, %v535
        %v559 = vadd.f32 %v483, %v537
        %v560 = vmul.f32 %v559, 0.5
        %v561 = vmul.f32 %v558, %v558
        %563 = vrot.lane.b32.xlu0 %v560, 96
        %v564 = vpop.permute.xlu0 %563
        %v566 = vrcp.pop %v564
        %v567 = vmul.f32 %v561, %v566
        %v568 = vsel %vm497, %v567, 0.0
        %569 = vadd.xlane.f32.xlu0 %v568
        %v570 = vpop.xlane.xlu0 %569
        %v571 = vmul.f32 %v570, 0.125
        %v572 = vlog2.pop %v560
        %v573 = vmul.f32 %v572, 0.6931472
        %575 = vrot.lane.b32.xlu0 %v573, 96
        %v576 = vpop.permute.xlu0 %575
        %v578 = vsel %vm497, %v576, 0.0
        %579 = vadd.xlane.f32.xlu0 %v578
        %v580 = vpop.xlane.xlu0 %579
        %v581 = vadd.f32 %v543, %v550
        %v582 = vmul.f32 %v581, 0.5
        %v583 = vsub.f32 %v580, %v582
        %v584 = vmul.f32 %v583, 0.5
        %v585 = vadd.f32 %v571, %v584
        %v586 = vsub.f32 %v481, %v538
        %v587 = vadd.f32 %v483, %v540
        %v588 = vmul.f32 %v587, 0.5
        %v589 = vmul.f32 %v586, %v586
        %591 = vrot.lane.b32.xlu0 %v588, 96
        %v592 = vpop.permute.xlu0 %591
        %v594 = vrcp.pop %v592
        %v595 = vmul.f32 %v589, %v594
        %v596 = vsel %vm497, %v595, 0.0
        %597 = vadd.xlane.f32.xlu0 %v596
        %v598 = vpop.xlane.xlu0 %597
        %v599 = vmul.f32 %v598, 0.125
        %v600 = vlog2.pop %v588
        %v601 = vmul.f32 %v600, 0.6931472
        %603 = vrot.lane.b32.xlu0 %v601, 96
        %v604 = vpop.permute.xlu0 %603
        %v606 = vsel %vm497, %v604, 0.0
        %607 = vadd.xlane.f32.xlu0 %v606
        %v608 = vpop.xlane.xlu0 %607
        %v609 = vadd.f32 %v543, %v557
        %v610 = vmul.f32 %v609, 0.5
        %v611 = vsub.f32 %v608, %v610
        %v612 = vmul.f32 %v611, 0.5
        %v613 = vadd.f32 %v599, %v612
        %v614 = vld [vmem:[%s411] sm:$0xff]
        %v615 = vstv %s480
        %vm616 = vcmp.lt.s32.totalorder %v524, %v615
        %v617 = vsel %vm616, 1, 0
        %v618 = vcvt.s32.f32 %v617
        %v619 = vsub.f32 %v613, %v585
        %v620 = vmul.f32 %v619, %v614
        %v621 = vadd.f32 %v620, 0.2
        %v622 = vand.u32 2147483647, %v614
        %v623 = vld [vmem:[%s457] sm:$0x1]
        %v624 = vmax.f32 %v621, 0.0
        %v625 = vmul.f32 %v624, %v622
        %v626 = vmul.f32 %v625, %v618
        %vm627 = vcmask 7168
        %v628 = vsel %vm627, %v626, 0.0
        %629 = vadd.xlane.f32.xlu0 %v628
        %v630 = vpop.xlane.xlu0 %629
        %v631 = vrot.slane %v630, 4
        %v632 = vadd.f32 %v630, %v631
        %v633 = vrot.slane %v632, 2
        %v634 = vadd.f32 %v632, %v633
        %v635 = vrot.slane %v634, 1
        %v636 = vadd.f32 %v634, %v635
        %s637 = vtos %v636
        %v638 = vstv %s637
        %v639 = vadd.f32 %v623, %v638
        %640 = vst.msk [vmem:[%s457] sm:$0x1] %vm511, %v639
        %v641 = vld [vmem:[%s463] sm:$0x1]
        %vm642 = vcmp.gt.f32.partialorder %v621, 0.0
        %v643 = vsel %vm642, 1, 0
        %v644 = vcvt.s32.f32 %v643
        %v645 = vmul.f32 %v644, %v622
        %v646 = vmul.f32 %v645, %v618
        %v647 = vsel %vm627, %v646, 0.0
        %648 = vadd.xlane.f32.xlu0 %v647
        %v649 = vpop.xlane.xlu0 %648
        %v650 = vrot.slane %v649, 4
        %v651 = vadd.f32 %v649, %v650
        %v652 = vrot.slane %v651, 2
        %v653 = vadd.f32 %v651, %v652
        %v654 = vrot.slane %v653, 1
        %v655 = vadd.f32 %v653, %v654
        %s656 = vtos %v655
        %v657 = vstv %s656
        %v658 = vadd.f32 %v641, %v657
        %659 = vst.msk [vmem:[%s463] sm:$0x1] %vm511, %v658
        %s660 = sand.u32 %s195, 1
        %s661 = scalar_lea.sflag [#allocation7], %s660
        %s662 = sand.u32 %s195, 1
        %s663 = scalar_lea.vmem [#allocation14], %s662
        %s664 = sand.u32 %s36, 1
        %s665 = scalar_lea.sflag [#allocation16], %s664
        %s666 = sand.u32 %s221, 1
        %s667 = scalar_lea.vmem [#allocation15], %s666
        %s668 = sand.u32 %s36, 1
        %s669 = scalar_lea.sflag [#allocation16], %s668
        %s670 = sand.u32 %s247, 1
        %s671 = scalar_lea.vmem [#allocation17], %s670
        // Predicated region
        $region65: #{prob_ordi_loss_forward.1} parent=39 // pred_check
          %p672 = pneg %p205
        $region66: #{prob_ordi_loss_forward.1} parent=39 // pred_check_branch
          %674 = sbr.rel (%p672) target = $region68
        $region67: #{prob_ordi_loss_forward.1} parent=39 // pred_region
          %s676 = ssub.s32 16, 16
          %677 = vsyncadd %s661, %s676
          %s678 = smul.addr %s40, 16
          %s679 = scalar_lea.hbm %s6, %s678
          %s681 = sshll.u32 %s663, 4
          %s682 = int_to_ptr.vmem [resolvable:$true] %s681
          %684 = dma.vmem_to_hbm [thread:$0]  %s682, 16, %s679, %s661
        $region68: #{prob_ordi_loss_forward.1} parent=39 // pred_fallthru
          _
        // Predicated region
        $region69: #{prob_ordi_loss_forward.1} parent=39 // pred_check
          %p685 = pneg %p231
        $region70: #{prob_ordi_loss_forward.1} parent=39 // pred_check_branch
          %687 = sbr.rel (%p685) target = $region72
        $region71: #{prob_ordi_loss_forward.1} parent=39 // pred_region
          %s689 = ssub.s32 16, 16
          %690 = vsyncadd %s665, %s689
          %s691 = smul.addr %s40, 16
          %s692 = scalar_lea.hbm %s7, %s691
          %s694 = sshll.u32 %s667, 4
          %s695 = int_to_ptr.vmem [resolvable:$true] %s694
          %697 = dma.vmem_to_hbm [thread:$0]  %s695, 16, %s692, %s665
        $region72: #{prob_ordi_loss_forward.1} parent=39 // pred_fallthru
          _
        // Predicated region
        $region73: #{prob_ordi_loss_forward.1} parent=39 // pred_check
          %p698 = pneg %p257
        $region74: #{prob_ordi_loss_forward.1} parent=39 // pred_check_branch
          %700 = sbr.rel (%p698) target = $region76
        $region75: #{prob_ordi_loss_forward.1} parent=39 // pred_region
          %s702 = ssub.s32 16, 16
          %703 = vsyncadd %s669, %s702
          %s704 = smul.addr %s40, 16
          %s705 = scalar_lea.hbm %s8, %s704
          %s707 = sshll.u32 %s671, 4
          %s708 = int_to_ptr.vmem [resolvable:$true] %s707
          %710 = dma.vmem_to_hbm [thread:$0]  %s708, 16, %s705, %s669
        $region76: #{prob_ordi_loss_forward.1} parent=39 // pred_fallthru
          _
      $region40: #{prob_ordi_loss_forward.1} parent=5 // pred_fallthru
        _
      %p711 = scmp.le.s32.totalorder 2, %s31
      // Predicated region
      $region77: #{prob_ordi_loss_forward.1} parent=5 // pred_check
        %p712 = pneg %p711
      $region78: #{prob_ordi_loss_forward.1} parent=5 // pred_check_branch
        %714 = sbr.rel (%p712) target = $region80
      $region79: #{prob_ordi_loss_forward.1} parent=5 // pred_region
        %s715 = ssub.s32 %s31, 2
        // Predicated region
        $region81: #{prob_ordi_loss_forward.1} parent=79 // pred_check
          %p716 = pneg %p211
        $region82: #{prob_ordi_loss_forward.1} parent=79 // pred_check_branch
          %718 = sbr.rel (%p716) target = $region84
        $region83: #{prob_ordi_loss_forward.1} parent=79 // pred_region
          %s719 = sand.u32 %s196, 1
          %s720 = scalar_lea.sflag [#allocation7], %s719
          %s721 = sand.u32 %s196, 1
          %s722 = scalar_lea.vmem [#allocation14], %s721
          %723 = dma.done %s720, 16
        $region84: #{prob_ordi_loss_forward.1} parent=79 // pred_fallthru
          _
        // Predicated region
        $region85: #{prob_ordi_loss_forward.1} parent=79 // pred_check
          %p724 = pneg %p237
        $region86: #{prob_ordi_loss_forward.1} parent=79 // pred_check_branch
          %726 = sbr.rel (%p724) target = $region88
        $region87: #{prob_ordi_loss_forward.1} parent=79 // pred_region
          %s727 = sand.u32 %s37, 1
          %s728 = scalar_lea.sflag [#allocation16], %s727
          %s729 = sand.u32 %s222, 1
          %s730 = scalar_lea.vmem [#allocation15], %s729
          %731 = dma.done %s728, 16
        $region88: #{prob_ordi_loss_forward.1} parent=79 // pred_fallthru
          _
        // Predicated region
        $region89: #{prob_ordi_loss_forward.1} parent=79 // pred_check
          %p732 = pneg %p263
        $region90: #{prob_ordi_loss_forward.1} parent=79 // pred_check_branch
          %734 = sbr.rel (%p732) target = $region92
        $region91: #{prob_ordi_loss_forward.1} parent=79 // pred_region
          %s735 = sand.u32 %s37, 1
          %s736 = scalar_lea.sflag [#allocation16], %s735
          %s737 = sand.u32 %s248, 1
          %s738 = scalar_lea.vmem [#allocation17], %s737
          %739 = dma.done %s736, 16
        $region92: #{prob_ordi_loss_forward.1} parent=79 // pred_fallthru
          _
      $region80: #{prob_ordi_loss_forward.1} parent=5 // pred_fallthru
        _
    $region6: #{prob_ordi_loss_forward.1} parent=1 // loop_footer
      %s35 = sadd.s32 1, %s31
    $region7: #{prob_ordi_loss_forward.1} parent=1 // loop_footer_branch
      %30 = sbr.rel target = $region3
    $region8: #{prob_ordi_loss_forward.1} parent=1 // loop_exit
      _
    %740 = vsyncpa [#allocation6], 1
    %s741 = scalar_lea.sflag [#allocation6], 1
    %742 = vsyncpa %s741, 1
    %743 = vsyncpa [#allocation9], 1
    %s744 = scalar_lea.sflag [#allocation9], 1
    %745 = vsyncpa %s744, 1
    %746 = vsyncpa [#allocation12], 1
    %s747 = scalar_lea.sflag [#allocation12], 1
    %748 = vsyncpa %s747, 1
    %749 = vsyncpa [#allocation7], 1
    %s750 = scalar_lea.sflag [#allocation7], 1
    %751 = vsyncpa %s750, 1
    %752 = vsyncpa [#allocation16], 1
    %s753 = scalar_lea.sflag [#allocation16], 1
    %754 = vsyncpa %s753, 1

</llo_original>
